<compile_context>
chip_gen: v6e
topology: v6e:2x2x1
jax: 0.10.0
libtpu: 0.0.40
codegen_flags: <defaults>
</compile_context>

<pallas_src>
import functools

import numpy as np
import jax
import jax.numpy as jnp
from jax.experimental import pallas as pl
from jax.experimental.pallas import tpu as pltpu


def _pick_tc(C, target=256):
    """Channel tile: full C if small, else the largest multiple of 8 <= target dividing C."""
    if C <= target:
        return C
    tc = (target // 8) * 8
    while tc >= 8:
        if C % tc == 0:
            return tc
        tc -= 8
    return C


def _hmp_kernel(x_ref, m_ref, wsp_ref, wch_ref, fb_ref, o_ref, *, KK, mul):
    ct = pl.program_id(1)

    # cropped rfft2 (both axes, real|imag fused) as ONE bf16 MXU matmul, f32 acc
    f = jnp.dot(x_ref[0], m_ref[...], preferred_element_type=jnp.float32)  # (TC, 2*KK)
    fr = f[:, :KK]
    fi = f[:, KK:]
    mag = jnp.sqrt(fr * fr + fi * fi)                                      # (TC, KK)

    # spatial_encode: grouped full-window conv (groups=C); BN1 scale folded into wsp
    wsp = wsp_ref[0]                                                       # (mul, TC, KK)
    parts = [jnp.sum(mag * wsp[m], axis=-1).reshape(1, -1) for m in range(mul)]
    s_row = parts[0] if mul == 1 else jnp.concatenate(parts, axis=1)       # (1, mul*TC)

    # channel_encode: 1x1 conv as a lane-dense matvec; BN2 scale (and the
    # mul==1 residual identity) folded into wch in the wrapper.
    partial = jnp.dot(s_row, wch_ref[0], preferred_element_type=jnp.float32)  # (1, C)

    @pl.when(ct == 0)
    def _():
        o_ref[0] = fb_ref[...]          # folded BN biases (+ residual bias)

    o_ref[0] += partial


def harmonic_magnitude_pooling(x, params, crop, mul):
    """Pallas implementation of HarmonicMagnitudePooling.forward
    (dft_target='mag', eval-mode BatchNorm)."""
    B, C, H, W = x.shape
    Kr, Kc = crop
    assert Kr <= H and Kc <= W // 2 + 1
    KK = Kr * Kc
    w_sp, w_ch, (g1, be1, m1, v1), (g2, be2, m2, v2) = params
    eps = 1e-5

    TC = _pick_tc(C)
    assert C % TC == 0
    nct = C // TC

    # ---- fused DFT operator: (H*W, 2*Kr*Kc), columns = [real | imag] --------
    # rfft2(norm='forward')[u, v] = 1/(H*W) * sum_{h,w} x[h,w] exp(-2pi*i(uh/H + vw/W))
    hh = np.arange(H, dtype=np.float64)
    ww = np.arange(W, dtype=np.float64)
    uu = np.arange(Kr, dtype=np.float64)
    vv = np.arange(Kc, dtype=np.float64)
    theta = 2.0 * np.pi * (uu[:, None, None, None] * hh[None, None, :, None] / H
                           + vv[None, :, None, None] * ww[None, None, None, :] / W)
    norm = 1.0 / (H * W)
    m_real = (np.cos(theta) * norm).reshape(KK, H * W)
    m_imag = (-np.sin(theta) * norm).reshape(KK, H * W)
    mcat = np.ascontiguousarray(np.concatenate([m_real, m_imag], axis=0).T)   # (H*W, 2*KK)
    mcat_k = jnp.asarray(mcat, dtype=jnp.bfloat16)      # bf16 MXU pass, f32 accumulation

    # ---- fold BatchNorm (inference) and the mul==1 residual into the weights ----
    sc1 = g1 / jnp.sqrt(v1 + eps)                   # (C*mul,)
    bi1 = be1 - m1 * sc1
    sc2 = g2 / jnp.sqrt(v2 + eps)                   # (C,)
    bi2 = be2 - m2 * sc2

    # spatial conv weight -> (nct, mul, TC, KK), BN1 scale folded in
    wsp = w_sp.reshape(C, mul, KK) * sc1.reshape(C, mul, 1)
    wsp_k = wsp.reshape(nct, TC, mul, KK).transpose(0, 2, 1, 3).astype(jnp.float32)

    # channel conv weight -> per-tile (mul*TC, C), rows in (m-major, t-minor)
    # order matching s_row; BN2 scale + mul==1 residual identity folded in
    wch2 = w_ch.reshape(C, C * mul)                 # [c_out, c_in*mul + m]
    wchT = (wch2 * sc2[:, None]).T                  # (C*mul, C)
    if mul == 1:
        wchT = wchT + jnp.eye(C, dtype=wchT.dtype)  # out = s + channel_encode(s)
    wch_k = (wchT.reshape(nct, TC, mul, C).transpose(0, 2, 1, 3)
             .reshape(nct, mul * TC, C).astype(jnp.float32))

    # constant bias: BN2 bias + (BN1 bias pushed through the 1x1 conv + BN2 scale)
    # + residual BN1 bias (mul == 1)
    fb = bi2 + (wch2 @ bi1) * sc2
    if mul == 1:
        fb = fb + bi1
    fb_k = fb.reshape(1, C).astype(jnp.float32)

    # ---- x: bf16 stream, spatial dims pre-flattened (free metadata reshape) ----
    x_k = x.astype(jnp.bfloat16).reshape(B, C, H * W)

    kernel = functools.partial(_hmp_kernel, KK=KK, mul=mul)

    out = pl.pallas_call(
        kernel,
        out_shape=jax.ShapeDtypeStruct((B, 1, C), jnp.float32),
        grid_spec=pltpu.PrefetchScalarGridSpec(
            num_scalar_prefetch=0,
            grid=(B, nct),
            in_specs=[
                pl.BlockSpec((1, TC, H * W), lambda b, ct: (b, ct, 0)),       # x (bf16)
                pl.BlockSpec((H * W, 2 * KK), lambda b, ct: (0, 0)),          # DFT operator
                pl.BlockSpec((1, mul, TC, KK), lambda b, ct: (ct, 0, 0, 0)),  # spatial w
                pl.BlockSpec((1, mul * TC, C), lambda b, ct: (ct, 0, 0)),     # channel w
                pl.BlockSpec((1, C), lambda b, ct: (0, 0)),                   # folded bias
            ],
            out_specs=pl.BlockSpec((1, 1, C), lambda b, ct: (b, 0, 0)),
        ),
        compiler_params=pltpu.CompilerParams(
            dimension_semantics=("parallel", "arbitrary")),
    )(x_k, mcat_k, wsp_k, wch_k, fb_k)

    # torch.flatten(out, start_dim=1) with 1x1 spatial -> (B, C)
    return out.reshape(B, C)


def reference_numpy(x, params, crop, mul):
    """Pure-numpy reference matching the PyTorch forward (eval-mode BN)."""
    x = np.asarray(x, dtype=np.float32)
    w_sp = np.asarray(params[0], dtype=np.float32)
    w_ch = np.asarray(params[1], dtype=np.float32)
    g1, be1, m1, v1 = [np.asarray(a, dtype=np.float32) for a in params[2]]
    g2, be2, m2, v2 = [np.asarray(a, dtype=np.float32) for a in params[3]]
    B, C, H, W = x.shape
    Kr, Kc = crop
    eps = 1e-5

    xf = np.fft.rfft2(x, norm='forward')
    mag = np.abs(xf)[:, :, :Kr, :Kc].astype(np.float32)

    wsp_r = w_sp.reshape(C, mul, Kr, Kc)
    s = np.einsum('bcuv,cmuv->bcm', mag, wsp_r).reshape(B, C * mul)
    sc1 = g1 / np.sqrt(v1 + eps)
    s = s * sc1 + (be1 - m1 * sc1)

    cc = s @ w_ch.reshape(C, C * mul).T
    sc2 = g2 / np.sqrt(v2 + eps)
    cc = cc * sc2 + (be2 - m2 * sc2)

    return cc if mul > 1 else s + cc


if __name__ == "__main__":
    B, C, H, W = 2, 4, 16, 16
    crop = (4, 4)
    mul = 1  # module default -> residual branch

    key = jax.random.PRNGKey(0)
    ks = jax.random.split(key, 12)
    x = jax.random.normal(ks[0], (B, C, H, W), dtype=jnp.float32)

    # deterministic synthetic parameters (shapes from the module's __init__)
    w_sp = 0.1 * jax.random.normal(ks[1], (C * mul, 1, crop[0], crop[1]), dtype=jnp.float32)
    w_ch = 0.1 * jax.random.normal(ks[2], (C, C * mul, 1, 1), dtype=jnp.float32)
    g1 = jax.random.uniform(ks[3], (C * mul,), minval=0.5, maxval=1.5, dtype=jnp.float32)
    be1 = 0.1 * jax.random.normal(ks[4], (C * mul,), dtype=jnp.float32)
    m1 = 0.1 * jax.random.normal(ks[5], (C * mul,), dtype=jnp.float32)
    v1 = jax.random.uniform(ks[6], (C * mul,), minval=0.5, maxval=1.5, dtype=jnp.float32)
    g2 = jax.random.uniform(ks[7], (C,), minval=0.5, maxval=1.5, dtype=jnp.float32)
    be2 = 0.1 * jax.random.normal(ks[8], (C,), dtype=jnp.float32)
    m2 = 0.1 * jax.random.normal(ks[9], (C,), dtype=jnp.float32)
    v2 = jax.random.uniform(ks[10], (C,), minval=0.5, maxval=1.5, dtype=jnp.float32)
    params = (w_sp, w_ch, (g1, be1, m1, v1), (g2, be2, m2, v2))

    out = harmonic_magnitude_pooling(x, params, crop, mul)
    out = jax.block_until_ready(out)

    ref = reference_numpy(x, params, crop, mul)
    assert out.shape == (B, C), (out.shape, (B, C))
    # bf16 streaming of x and of the DFT operator trades a little precision vs
    # the float64/float32 numpy rfft2 reference -> relaxed tolerances.
    np.testing.assert_allclose(np.asarray(out), ref, rtol=2e-2, atol=5e-3)
    print("KERNEL_OK")
</pallas_src>

<mosaic_0001>
module attributes {stable_mosaic.version = 11 : i64} {
  func.func @_hmp_kernel(%arg0: i32, %arg1: i32, %arg2: memref<1x4x256xbf16, #tpu.memory_space<vmem>>, %arg3: memref<256x32xbf16, #tpu.memory_space<vmem>>, %arg4: memref<1x1x4x16xf32, #tpu.memory_space<vmem>>, %arg5: memref<1x4x4xf32, #tpu.memory_space<vmem>>, %arg6: memref<1x4xf32, #tpu.memory_space<vmem>>, %arg7: memref<1x1x4xf32, #tpu.memory_space<vmem>>) attributes {dimension_semantics = [#tpu.dimension_semantics<parallel>, #tpu.dimension_semantics<arbitrary>], iteration_bounds = array<i64: 2, 1>, scalar_prefetch = 0 : i64, scratch_operands = 0 : i64, tpu.core_type = #tpu.core_type<tc>, window_params = [{transform_indices = @transform_0, window_bounds = array<i64: 1, 4, 256>}, {pipeline_mode = #tpu.pipeline_mode<synchronous>, transform_indices = @transform_1, window_bounds = array<i64: 256, 32>}, {transform_indices = @transform_2, window_bounds = array<i64: 1, 1, 4, 16>}, {transform_indices = @transform_3, window_bounds = array<i64: 1, 4, 4>}, {pipeline_mode = #tpu.pipeline_mode<synchronous>, transform_indices = @transform_4, window_bounds = array<i64: 1, 4>}, {transform_indices = @transform_5, window_bounds = array<i64: 1, 1, 4>}]} {
    %c0 = arith.constant 0 : index
    %c0_0 = arith.constant 0 : index
    %c0_1 = arith.constant 0 : index
    %0 = vector.load %arg2[%c0, %c0_0, %c0_1] : memref<1x4x256xbf16, #tpu.memory_space<vmem>>, vector<1x4x256xbf16>
    %1 = vector.shape_cast %0 : vector<1x4x256xbf16> to vector<4x256xbf16>
    %c0_2 = arith.constant 0 : index
    %c0_3 = arith.constant 0 : index
    %2 = vector.load %arg3[%c0_2, %c0_3] : memref<256x32xbf16, #tpu.memory_space<vmem>>, vector<256x32xbf16>
    %cst = arith.constant dense<0.000000e+00> : vector<4x32xf32>
    %3 = tpu.matmul %1, %2, %cst {dimension_numbers = #tpu.dot_dimension_numbers<[1], [0], [0], [1], [0, 0, 1, 1], [], []>} : vector<4x256xbf16>, vector<256x32xbf16>, vector<4x32xf32> -> vector<4x32xf32>
    %4 = vector.extract_strided_slice %3 {offsets = [0, 0], sizes = [4, 16], strides = [1, 1]} : vector<4x32xf32> to vector<4x16xf32>
    %5 = vector.extract_strided_slice %3 {offsets = [0, 16], sizes = [4, 16], strides = [1, 1]} : vector<4x32xf32> to vector<4x16xf32>
    %6 = arith.mulf %4, %4 : vector<4x16xf32>
    %7 = arith.mulf %5, %5 : vector<4x16xf32>
    %8 = arith.addf %6, %7 : vector<4x16xf32>
    %9 = math.sqrt %8 : vector<4x16xf32>
    %c0_4 = arith.constant 0 : index
    %c0_5 = arith.constant 0 : index
    %c0_6 = arith.constant 0 : index
    %c0_7 = arith.constant 0 : index
    %10 = vector.load %arg4[%c0_4, %c0_5, %c0_6, %c0_7] : memref<1x1x4x16xf32, #tpu.memory_space<vmem>>, vector<1x1x4x16xf32>
    %11 = vector.shape_cast %10 : vector<1x1x4x16xf32> to vector<1x4x16xf32>
    %12 = vector.shape_cast %11 : vector<1x4x16xf32> to vector<4x16xf32>
    %13 = arith.mulf %9, %12 : vector<4x16xf32>
    %cst_8 = arith.constant dense<0.000000e+00> : vector<4xf32>
    %14 = vector.multi_reduction <add>, %13, %cst_8 [1] : vector<4x16xf32> to vector<4xf32>
    %15 = vector.shape_cast %14 : vector<4xf32> to vector<1x4xf32>
    %c0_9 = arith.constant 0 : index
    %c0_10 = arith.constant 0 : index
    %c0_11 = arith.constant 0 : index
    %16 = vector.load %arg5[%c0_9, %c0_10, %c0_11] : memref<1x4x4xf32, #tpu.memory_space<vmem>>, vector<1x4x4xf32>
    %17 = vector.shape_cast %16 : vector<1x4x4xf32> to vector<4x4xf32>
    %cst_12 = arith.constant dense<0.000000e+00> : vector<1x4xf32>
    %18 = tpu.matmul %15, %17, %cst_12 {dimension_numbers = #tpu.dot_dimension_numbers<[1], [0], [0], [1], [0, 0, 1, 1], [], []>} : vector<1x4xf32>, vector<4x4xf32>, vector<1x4xf32> -> vector<1x4xf32>
    %c0_i32 = arith.constant 0 : i32
    %19 = arith.cmpi eq, %arg1, %c0_i32 : i32
    %20 = arith.extui %19 : i1 to i32
    %c0_i32_13 = arith.constant 0 : i32
    %21 = arith.cmpi ne, %20, %c0_i32_13 : i32
    scf.if %21 {
      %c0_20 = arith.constant 0 : index
      %c0_21 = arith.constant 0 : index
      %28 = vector.load %arg6[%c0_20, %c0_21] : memref<1x4xf32, #tpu.memory_space<vmem>>, vector<1x4xf32>
      %c0_22 = arith.constant 0 : index
      %c0_23 = arith.constant 0 : index
      %c0_24 = arith.constant 0 : index
      %29 = vector.load %arg7[%c0_22, %c0_23, %c0_24] : memref<1x1x4xf32, #tpu.memory_space<vmem>>, vector<1x1x4xf32>
      %30 = vector.shape_cast %29 : vector<1x1x4xf32> to vector<1x4xf32>
      %31 = vector.shape_cast %28 : vector<1x4xf32> to vector<1x1x4xf32>
      tpu.vector_store %arg7[%c0_22, %c0_23, %c0_24], %31 {strides = array<i32>} : memref<1x1x4xf32, #tpu.memory_space<vmem>>, vector<1x1x4xf32>,
    } else {
    }
    %c0_14 = arith.constant 0 : index
    %c0_15 = arith.constant 0 : index
    %c0_16 = arith.constant 0 : index
    %22 = vector.load %arg7[%c0_14, %c0_15, %c0_16] : memref<1x1x4xf32, #tpu.memory_space<vmem>>, vector<1x1x4xf32>
    %23 = vector.shape_cast %22 : vector<1x1x4xf32> to vector<1x4xf32>
    %24 = arith.addf %23, %18 : vector<1x4xf32>
    %c0_17 = arith.constant 0 : index
    %c0_18 = arith.constant 0 : index
    %c0_19 = arith.constant 0 : index
    %25 = vector.load %arg7[%c0_17, %c0_18, %c0_19] : memref<1x1x4xf32, #tpu.memory_space<vmem>>, vector<1x1x4xf32>
    %26 = vector.shape_cast %25 : vector<1x1x4xf32> to vector<1x4xf32>
    %27 = vector.shape_cast %24 : vector<1x4xf32> to vector<1x1x4xf32>
    tpu.vector_store %arg7[%c0_17, %c0_18, %c0_19], %27 {strides = array<i32>} : memref<1x1x4xf32, #tpu.memory_space<vmem>>, vector<1x1x4xf32>,
    return
  }
  func.func @transform_0(%arg0: i32, %arg1: i32) -> (i32, i32, i32) {
    %c0_i32 = arith.constant 0 : i32
    %c0_i32_0 = arith.constant 0 : i32
    return %arg0, %arg1, %c0_i32 : i32, i32, i32
  }
  func.func @transform_1(%arg0: i32, %arg1: i32) -> (i32, i32) {
    %c0_i32 = arith.constant 0 : i32
    %c0_i32_0 = arith.constant 0 : i32
    %c0_i32_1 = arith.constant 0 : i32
    return %c0_i32, %c0_i32_0 : i32, i32
  }
  func.func @transform_2(%arg0: i32, %arg1: i32) -> (i32, i32, i32, i32) {
    %c0_i32 = arith.constant 0 : i32
    %c0_i32_0 = arith.constant 0 : i32
    %c0_i32_1 = arith.constant 0 : i32
    %c0_i32_2 = arith.constant 0 : i32
    return %arg1, %c0_i32, %c0_i32_0, %c0_i32_1 : i32, i32, i32, i32
  }
  func.func @transform_3(%arg0: i32, %arg1: i32) -> (i32, i32, i32) {
    %c0_i32 = arith.constant 0 : i32
    %c0_i32_0 = arith.constant 0 : i32
    %c0_i32_1 = arith.constant 0 : i32
    return %arg1, %c0_i32, %c0_i32_0 : i32, i32, i32
  }
  func.func @transform_4(%arg0: i32, %arg1: i32) -> (i32, i32) {
    %c0_i32 = arith.constant 0 : i32
    %c0_i32_0 = arith.constant 0 : i32
    %c0_i32_1 = arith.constant 0 : i32
    return %c0_i32, %c0_i32_0 : i32, i32
  }
  func.func @transform_5(%arg0: i32, %arg1: i32) -> (i32, i32, i32) {
    %c0_i32 = arith.constant 0 : i32
    %c0_i32_0 = arith.constant 0 : i32
    %c0_i32_1 = arith.constant 0 : i32
    return %arg0, %c0_i32, %c0_i32_0 : i32, i32, i32
  }
}

</mosaic_0001>

<llo_original>
// kernel: tpu_custom_call.1
$region0: #{tpu_custom_call.1}
  #allocation0 [shape = 'u32[]', space=smem, size = 0x4, offset = 0x4, fixed_abs, tag = 'smem constant byte address 0x4 - core index']
  #allocation1 [shape = 'u32[144,128]{1,0:T(1,128)}', space=vmem, size = 0x12000, scoped, tag = 'internal scratch']
  %s0 = inlined_call_operand.vmem [shape: bf16[2,4,256], index: 0, kind: input, shape index: {}]
  %s1 = inlined_call_operand.vmem [shape: bf16[256,32], index: 1, kind: input, shape index: {}]
  %s2 = inlined_call_operand.vmem [shape: f32[1,1,4,16], index: 2, kind: input, shape index: {}]
  %s3 = inlined_call_operand.vmem [shape: f32[1,4,4], index: 3, kind: input, shape index: {}]
  %s4 = inlined_call_operand.vmem [shape: f32[1,4], index: 4, kind: input, shape index: {}]
  %s5 = inlined_call_operand.hbm [shape: f32[2,1,4], index: 5, kind: output, shape index: {}]
  %s6 = sld [smem:[#allocation0]]
  $region57: #{tpu_custom_call.1} parent=0
    _
  %s8 = ssub.s32 1, %s6
  %s9 = scalar_select 0, %s8, %s6
  $region1: #{tpu_custom_call.1} parent=0
    #allocation2 [shape = 'u8[1024]{0}', space=vmem, size = 0x400, scoped, tag = 'output window, operand 0']
    #allocation3 [shape = 's32[2]{0}', space=sflag, size = 0x8, scoped, tag = 'scoped memory for tpu_custom_call.1']
    %10 = vsyncpa [#allocation3], 0
    %s11 = scalar_lea.sflag [#allocation3], 1
    %12 = vsyncpa %s11, 0
    loop: start=0, step=1, limit=4
    $region2: #{tpu_custom_call.1} parent=1 // loop_pre_header
      _
    $region3: #{tpu_custom_call.1} parent=1 // loop_header
      %s14 = sphi 0, %s18
      %p15 = scmp.ge.s32.totalorder %s14, 4
      %s21 = sphi 0, %s33
      %s22 = sphi 0, %s29
      %s23 = sphi 0, %s21
      %s24 = sphi 0, %s22
      %s25 = sphi 0, %s23
      %s26 = sphi 0, %s24
      %s38 = sphi 0, %s40
      %s41 = sphi 0, %s38
      %s42 = sphi 0, %s41
      %s58 = sphi 0, %s42
      %s62 = sphi 0, %s62
      %s64 = sphi 0, %s62
      %s65 = sphi 0, %s64
      %s79 = sphi 0, %s65
      %s85 = sphi 0, %s87
      %s88 = sphi 0, %s85
      %s89 = sphi 0, %s88
      %s105 = sphi 0, %s89
      %s111 = sphi 0, %s113
      %s114 = sphi 0, %s111
      %s115 = sphi 0, %s114
      %s131 = sphi 0, %s115
      %s135 = sphi 0, %s135
      %s137 = sphi 0, %s135
      %s138 = sphi 0, %s137
      %s152 = sphi 0, %s138
      %s158 = sphi 0, %s160
      %s161 = sphi 0, %s158
      %s162 = sphi 0, %s161
      %s178 = sphi 0, %s162
    $region4: #{tpu_custom_call.1} parent=1 // loop_header_branch
      %17 = sbr.rel (%p15) target = $region8
    $region5: #{tpu_custom_call.1} parent=1 // loop_body
      %s19 = ssub.s32 %s14, 1
      %s20 = ssub.s32 %s14, 2
      %s27 = sadd.s32 1, %s22
      %p28 = scmp.ge.s32.totalorder %s27, 1
      %s29 = scalar_select %p28, 0, %s27
      %s30 = sadd.s32 1, %s21
      %s31 = scalar_select %p28, %s30, %s21
      %p32 = scmp.ge.s32.totalorder %s31, 2
      %s33 = scalar_select %p32, 0, %s31
      %s34 = ssub.s32 %s21, %s33
      %s35 = ssub.s32 %s22, %s29
      %s36 = sor.u32 %s34, %s35
      %p37 = scmp.eq.s32.totalorder %s36, 0
      %s39 = sadd.s32 %s38, 1
      %s40 = scalar_select %p37, %s38, %s39
      %p43 = pneg %p37
      %p44 = scmp.eq.s32.totalorder %s14, 1
      %p45 = por %p43, %p44
      %p46 = scmp.ne.s32.totalorder %s38, %s41
      %p47 = scmp.eq.s32.totalorder %s14, 0
      %p48 = por %p46, %p47
      %p49 = scmp.ne.s32.totalorder %s38, %s41
      %p50 = scmp.eq.s32.totalorder %s19, 1
      %p51 = por %p49, %p50
      %p52 = scmp.ne.s32.totalorder %s41, %s42
      %p53 = scmp.eq.s32.totalorder %s19, 0
      %p54 = por %p52, %p53
      %p55 = scmp.ne.s32.totalorder %s41, %s42
      %p56 = scmp.eq.s32.totalorder %s20, 1
      %p57 = por %p55, %p56
      %p59 = scmp.ne.s32.totalorder %s42, %s58
      %p60 = scmp.eq.s32.totalorder %s20, 0
      %p61 = por %p59, %p60
      %s63 = sadd.s32 %s62, 1
      %p66 = scmp.eq.s32.totalorder %s14, 1
      %p67 = scmp.ne.s32.totalorder %s62, %s64
      %p68 = scmp.eq.s32.totalorder %s14, 0
      %p69 = por %p67, %p68
      %p70 = scmp.ne.s32.totalorder %s62, %s64
      %p71 = scmp.eq.s32.totalorder %s19, 1
      %p72 = por %p70, %p71
      %p73 = scmp.ne.s32.totalorder %s64, %s65
      %p74 = scmp.eq.s32.totalorder %s19, 0
      %p75 = por %p73, %p74
      %p76 = scmp.ne.s32.totalorder %s64, %s65
      %p77 = scmp.eq.s32.totalorder %s20, 1
      %p78 = por %p76, %p77
      %p80 = scmp.ne.s32.totalorder %s65, %s79
      %p81 = scmp.eq.s32.totalorder %s20, 0
      %p82 = por %p80, %p81
      %s83 = ssub.s32 %s22, %s29
      %p84 = scmp.eq.s32.totalorder %s83, 0
      %s86 = sadd.s32 %s85, 1
      %s87 = scalar_select %p84, %s85, %s86
      %p90 = pneg %p84
      %p91 = scmp.eq.s32.totalorder %s14, 1
      %p92 = por %p90, %p91
      %p93 = scmp.ne.s32.totalorder %s85, %s88
      %p94 = scmp.eq.s32.totalorder %s14, 0
      %p95 = por %p93, %p94
      %p96 = scmp.ne.s32.totalorder %s85, %s88
      %p97 = scmp.eq.s32.totalorder %s19, 1
      %p98 = por %p96, %p97
      %p99 = scmp.ne.s32.totalorder %s88, %s89
      %p100 = scmp.eq.s32.totalorder %s19, 0
      %p101 = por %p99, %p100
      %p102 = scmp.ne.s32.totalorder %s88, %s89
      %p103 = scmp.eq.s32.totalorder %s20, 1
      %p104 = por %p102, %p103
      %p106 = scmp.ne.s32.totalorder %s89, %s105
      %p107 = scmp.eq.s32.totalorder %s20, 0
      %p108 = por %p106, %p107
      %s109 = ssub.s32 %s22, %s29
      %p110 = scmp.eq.s32.totalorder %s109, 0
      %s112 = sadd.s32 %s111, 1
      %s113 = scalar_select %p110, %s111, %s112
      %p116 = pneg %p110
      %p117 = scmp.eq.s32.totalorder %s14, 1
      %p118 = por %p116, %p117
      %p119 = scmp.ne.s32.totalorder %s111, %s114
      %p120 = scmp.eq.s32.totalorder %s14, 0
      %p121 = por %p119, %p120
      %p122 = scmp.ne.s32.totalorder %s111, %s114
      %p123 = scmp.eq.s32.totalorder %s19, 1
      %p124 = por %p122, %p123
      %p125 = scmp.ne.s32.totalorder %s114, %s115
      %p126 = scmp.eq.s32.totalorder %s19, 0
      %p127 = por %p125, %p126
      %p128 = scmp.ne.s32.totalorder %s114, %s115
      %p129 = scmp.eq.s32.totalorder %s20, 1
      %p130 = por %p128, %p129
      %p132 = scmp.ne.s32.totalorder %s115, %s131
      %p133 = scmp.eq.s32.totalorder %s20, 0
      %p134 = por %p132, %p133
      %s136 = sadd.s32 %s135, 1
      %p139 = scmp.eq.s32.totalorder %s14, 1
      %p140 = scmp.ne.s32.totalorder %s135, %s137
      %p141 = scmp.eq.s32.totalorder %s14, 0
      %p142 = por %p140, %p141
      %p143 = scmp.ne.s32.totalorder %s135, %s137
      %p144 = scmp.eq.s32.totalorder %s19, 1
      %p145 = por %p143, %p144
      %p146 = scmp.ne.s32.totalorder %s137, %s138
      %p147 = scmp.eq.s32.totalorder %s19, 0
      %p148 = por %p146, %p147
      %p149 = scmp.ne.s32.totalorder %s137, %s138
      %p150 = scmp.eq.s32.totalorder %s20, 1
      %p151 = por %p149, %p150
      %p153 = scmp.ne.s32.totalorder %s138, %s152
      %p154 = scmp.eq.s32.totalorder %s20, 0
      %p155 = por %p153, %p154
      %s156 = ssub.s32 %s21, %s33
      %p157 = scmp.eq.s32.totalorder %s156, 0
      %s159 = sadd.s32 %s158, 1
      %s160 = scalar_select %p157, %s158, %s159
      %p163 = pneg %p157
      %p164 = scmp.eq.s32.totalorder %s14, 1
      %p165 = por %p163, %p164
      %p166 = scmp.ne.s32.totalorder %s158, %s161
      %p167 = scmp.eq.s32.totalorder %s14, 0
      %p168 = por %p166, %p167
      %p169 = scmp.ne.s32.totalorder %s158, %s161
      %p170 = scmp.eq.s32.totalorder %s19, 1
      %p171 = por %p169, %p170
      %p172 = scmp.ne.s32.totalorder %s161, %s162
      %p173 = scmp.eq.s32.totalorder %s19, 0
      %p174 = por %p172, %p173
      %p175 = scmp.ne.s32.totalorder %s161, %s162
      %p176 = scmp.eq.s32.totalorder %s20, 1
      %p177 = por %p175, %p176
      %p179 = scmp.ne.s32.totalorder %s162, %s178
      %p180 = scmp.eq.s32.totalorder %s20, 0
      %p181 = por %p179, %p180
      %p182 = scmp.le.s32.totalorder 1, %s14
      %p183 = scmp.lt.s32.totalorder %s14, 3
      %p184 = pnand %p182, %p183
      %p185 = pneg %p184
      // Predicated region
      $region9: #{tpu_custom_call.1} parent=5 // pred_check
        _
      $region10: #{tpu_custom_call.1} parent=5 // pred_check_branch
        %187 = sbr.rel (%p184) target = $region12
      $region11: #{tpu_custom_call.1} parent=5 // pred_region
        %s188 = ssub.s32 %s14, 1
        // Predicated region
        $region13: #{tpu_custom_call.1} parent=11 // pred_check
          %p189 = pneg %p75
        $region14: #{tpu_custom_call.1} parent=11 // pred_check_branch
          %191 = sbr.rel (%p189) target = $region16
        $region15: #{tpu_custom_call.1} parent=11 // pred_region
          _
        $region16: #{tpu_custom_call.1} parent=11 // pred_fallthru
          _
        // Predicated region
        $region17: #{tpu_custom_call.1} parent=11 // pred_check
          %p192 = pneg %p101
        $region18: #{tpu_custom_call.1} parent=11 // pred_check_branch
          %194 = sbr.rel (%p192) target = $region20
        $region19: #{tpu_custom_call.1} parent=11 // pred_region
          %p195 = scmp.lt.s32.totalorder %s24, 0
          %s196 = scalar_select %p195, %s24, 0
          %s197 = smul.addr %s196, 4
          %s198 = scalar_lea.vmem %s2, %s197
        $region20: #{tpu_custom_call.1} parent=11 // pred_fallthru
          _
        // Predicated region
        $region21: #{tpu_custom_call.1} parent=11 // pred_check
          %p199 = pneg %p127
        $region22: #{tpu_custom_call.1} parent=11 // pred_check_branch
          %201 = sbr.rel (%p199) target = $region24
        $region23: #{tpu_custom_call.1} parent=11 // pred_region
          %p202 = scmp.lt.s32.totalorder %s24, 0
          %s203 = scalar_select %p202, %s24, 0
          %s204 = smul.addr %s203, 4
          %s205 = scalar_lea.vmem %s3, %s204
        $region24: #{tpu_custom_call.1} parent=11 // pred_fallthru
          _
        // Predicated region
        $region25: #{tpu_custom_call.1} parent=11 // pred_check
          %p206 = pneg %p148
        $region26: #{tpu_custom_call.1} parent=11 // pred_check_branch
          %208 = sbr.rel (%p206) target = $region28
        $region27: #{tpu_custom_call.1} parent=11 // pred_region
          _
        $region28: #{tpu_custom_call.1} parent=11 // pred_fallthru
          _
      $region12: #{tpu_custom_call.1} parent=5 // pred_fallthru
        _
      %p209 = scmp.lt.s32.totalorder %s14, 2
      // Predicated region
      $region29: #{tpu_custom_call.1} parent=5 // pred_check
        %p210 = pneg %p209
      $region30: #{tpu_custom_call.1} parent=5 // pred_check_branch
        %212 = sbr.rel (%p210) target = $region32
      $region31: #{tpu_custom_call.1} parent=5 // pred_region
        // Predicated region
        $region33: #{tpu_custom_call.1} parent=31 // pred_check
          %p213 = pneg %p48
        $region34: #{tpu_custom_call.1} parent=31 // pred_check_branch
          %215 = sbr.rel (%p213) target = $region36
        $region35: #{tpu_custom_call.1} parent=31 // pred_region
          %p216 = scmp.lt.s32.totalorder %s21, 1
          %s217 = scalar_select %p216, %s21, 1
          %p218 = scmp.lt.s32.totalorder %s22, 0
          %s219 = scalar_select %p218, %s22, 0
          %s220 = smul.addr %s219, 2
          %s221 = smul.addr %s217, 2
          %s222 = sadd.s32 %s220, %s221
          %s223 = smul.addr %s222, 2
          %s224 = scalar_lea.vmem %s0, %s223
        $region36: #{tpu_custom_call.1} parent=31 // pred_fallthru
          _
      $region32: #{tpu_custom_call.1} parent=5 // pred_fallthru
        _
      %p225 = scmp.le.s32.totalorder 1, %s14
      %p226 = scmp.lt.s32.totalorder %s14, 3
      %p227 = pnand %p225, %p226
      %p228 = pneg %p227
      // Predicated region
      $region37: #{tpu_custom_call.1} parent=5 // pred_check
        _
      $region38: #{tpu_custom_call.1} parent=5 // pred_check_branch
        %230 = sbr.rel (%p227) target = $region40
      $region39: #{tpu_custom_call.1} parent=5 // pred_region
        %s231 = ssub.s32 %s14, 1
        %p232 = scmp.lt.s32.totalorder %s23, 1
        %s233 = scalar_select %p232, %s23, 1
        %p234 = scmp.lt.s32.totalorder %s24, 0
        %s235 = scalar_select %p234, %s24, 0
        %s236 = smul.addr %s235, 2
        %s237 = smul.addr %s233, 2
        %s238 = sadd.s32 %s236, %s237
        %s239 = smul.addr %s238, 2
        %s240 = scalar_lea.vmem %s0, %s239
        %p241 = pneg %p54
        %p242 = pneg %p51
        %p243 = pneg %p75
        %p244 = pneg %p72
        %p245 = scmp.lt.s32.totalorder %s24, 0
        %s246 = scalar_select %p245, %s24, 0
        %s247 = smul.addr %s246, 4
        %s248 = scalar_lea.vmem %s2, %s247
        %p249 = pneg %p101
        %p250 = pneg %p98
        %p251 = scmp.lt.s32.totalorder %s24, 0
        %s252 = scalar_select %p251, %s24, 0
        %s253 = smul.addr %s252, 4
        %s254 = scalar_lea.vmem %s3, %s253
        %p255 = pneg %p127
        %p256 = pneg %p124
        %p257 = pneg %p148
        %p258 = pneg %p145
        %p259 = pneg %p174
        %p260 = pneg %p171
        %s261 = sand.u32 %s161, 1
        %s262 = scalar_lea.sflag [#allocation3], %s261
        %s263 = sand.u32 %s161, 1
        %s264 = scalar_lea.vmem [#allocation2], %s263
        %p265 = scmp.lt.s32.totalorder %s23, 1
        %s266 = scalar_select %p265, %s23, 1
        %p267 = scmp.lt.s32.totalorder %s24, 0
        %s268 = scalar_select %p267, %s24, 0
        %s269 = smul.addr %s268, 2
        %s270 = smul.addr %s266, 2
        %s271 = sadd.s32 %s269, %s270
        %s272 = smul.addr %s271, 2
        %s273 = scalar_lea.vmem %s0, %s272
        %p274 = scmp.lt.s32.totalorder %s24, 0
        %s275 = scalar_select %p274, %s24, 0
        %s276 = smul.addr %s275, 4
        %s277 = scalar_lea.vmem %s2, %s276
        %p278 = scmp.lt.s32.totalorder %s24, 0
        %s279 = scalar_select %p278, %s24, 0
        %s280 = smul.addr %s279, 4
        %s281 = scalar_lea.vmem %s3, %s280
        %v283 = vld [vmem:[%s273] sm:$0xf]
        %v284 = vld [vmem:[%s1] sm:$0xf]
        %v285 = vld [vmem:[%s1 + $0x4] sm:$0xf]
        %v286 = vld [vmem:[%s1 + $0x8] sm:$0xf]
        %v287 = vld [vmem:[%s1 + $0xc] sm:$0xf]
        %v288 = vld [vmem:[%s1 + $0x10] sm:$0xf]
        %v289 = vld [vmem:[%s1 + $0x14] sm:$0xf]
        %v290 = vld [vmem:[%s1 + $0x18] sm:$0xf]
        %v291 = vld [vmem:[%s1 + $0x1c] sm:$0xf]
        %v292 = vld [vmem:[%s1 + $0x20] sm:$0xf]
        %v293 = vld [vmem:[%s1 + $0x24] sm:$0xf]
        %v294 = vld [vmem:[%s1 + $0x28] sm:$0xf]
        %v295 = vld [vmem:[%s1 + $0x2c] sm:$0xf]
        %v296 = vld [vmem:[%s1 + $0x30] sm:$0xf]
        %v297 = vld [vmem:[%s1 + $0x34] sm:$0xf]
        %v298 = vld [vmem:[%s1 + $0x38] sm:$0xf]
        %v299 = vld [vmem:[%s1 + $0x3c] sm:$0xf]
        %v300 = vld [vmem:[%s1 + $0x40] sm:$0xf]
        %v301 = vld [vmem:[%s1 + $0x44] sm:$0xf]
        %v302 = vld [vmem:[%s1 + $0x48] sm:$0xf]
        %v303 = vld [vmem:[%s1 + $0x4c] sm:$0xf]
        %v304 = vld [vmem:[%s1 + $0x50] sm:$0xf]
        %v305 = vld [vmem:[%s1 + $0x54] sm:$0xf]
        %v306 = vld [vmem:[%s1 + $0x58] sm:$0xf]
        %v307 = vld [vmem:[%s1 + $0x5c] sm:$0xf]
        %v308 = vld [vmem:[%s1 + $0x60] sm:$0xf]
        %v309 = vld [vmem:[%s1 + $0x64] sm:$0xf]
        %v310 = vld [vmem:[%s1 + $0x68] sm:$0xf]
        %v311 = vld [vmem:[%s1 + $0x6c] sm:$0xf]
        %v312 = vld [vmem:[%s1 + $0x70] sm:$0xf]
        %v313 = vld [vmem:[%s1 + $0x74] sm:$0xf]
        %v314 = vld [vmem:[%s1 + $0x78] sm:$0xf]
        %v315 = vld [vmem:[%s1 + $0x7c] sm:$0xf]
        %v318 = vunpack.c.l.s4 1983009808
        %v319 = vunpack.c.0.s8 %v318
        %v320 = vlaneseq
        %v321 = vshrl.u32 %v320, 7
        %v322 = vsub.s32 %v319, %v321
        %v323 = vrot.slane %v283, %v322
        %v324 = vcombine.high %v323, %v323
        %v359 = vunpack.c.l.b16 %v284
        %v360 = vunpack.c.l.b16 %v285
        %v361 = vunpack.c.l.b16 %v286
        %v362 = vunpack.c.l.b16 %v287
        %v363 = vunpack.c.l.b16 %v288
        %v364 = vunpack.c.l.b16 %v289
        %v365 = vunpack.c.l.b16 %v290
        %v366 = vunpack.c.l.b16 %v291
        %v367 = vunpack.c.l.b16 %v292
        %v368 = vunpack.c.l.b16 %v293
        %v369 = vunpack.c.l.b16 %v294
        %v370 = vunpack.c.l.b16 %v295
        %v371 = vunpack.c.l.b16 %v296
        %v372 = vunpack.c.l.b16 %v297
        %v373 = vunpack.c.l.b16 %v298
        %v374 = vunpack.c.l.b16 %v299
        %v375 = vunpack.c.l.b16 %v300
        %v376 = vunpack.c.l.b16 %v301
        %v377 = vunpack.c.l.b16 %v302
        %v378 = vunpack.c.l.b16 %v303
        %v379 = vunpack.c.l.b16 %v304
        %v380 = vunpack.c.l.b16 %v305
        %v381 = vunpack.c.l.b16 %v306
        %v382 = vunpack.c.l.b16 %v307
        %v383 = vunpack.c.l.b16 %v308
        %v384 = vunpack.c.l.b16 %v309
        %v385 = vunpack.c.l.b16 %v310
        %v386 = vunpack.c.l.b16 %v311
        %v387 = vunpack.c.l.b16 %v312
        %v388 = vunpack.c.l.b16 %v313
        %v389 = vunpack.c.l.b16 %v314
        %v390 = vunpack.c.l.b16 %v315
        %v391 = vpack.c.b16 %v360, %v359
        %v392 = vpack.c.b16 %v362, %v361
        %v393 = vpack.c.b16 %v364, %v363
        %v394 = vpack.c.b16 %v366, %v365
        %v395 = vpack.c.b16 %v368, %v367
        %v396 = vpack.c.b16 %v370, %v369
        %v397 = vpack.c.b16 %v372, %v371
        %v398 = vpack.c.b16 %v374, %v373
        %v399 = vpack.c.b16 %v376, %v375
        %v400 = vpack.c.b16 %v378, %v377
        %v401 = vpack.c.b16 %v380, %v379
        %v402 = vpack.c.b16 %v382, %v381
        %v403 = vpack.c.b16 %v384, %v383
        %v404 = vpack.c.b16 %v386, %v385
        %v405 = vpack.c.b16 %v388, %v387
        %v406 = vpack.c.b16 %v390, %v389
        %423 = vmatprep.subr.bf16.mxu0 0
        %424 = vmatpush1.bf16.msra.mxu0 %v398
        %425 = vmatprep.subr.bf16.mxu0 0
        %426 = vmatpush1.bf16.msra.mxu0 %v397
        %427 = vmatprep.subr.bf16.mxu0 0
        %428 = vmatpush1.bf16.msra.mxu0 %v396
        %429 = vmatprep.subr.bf16.mxu0 0
        %430 = vmatpush1.bf16.msra.mxu0 %v395
        %431 = vmatprep.subr.bf16.mxu0 0
        %432 = vmatpush1.bf16.msra.mxu0 %v394
        %433 = vmatprep.subr.bf16.mxu0 0
        %434 = vmatpush1.bf16.msra.mxu0 %v393
        %435 = vmatprep.subr.bf16.mxu0 0
        %436 = vmatpush1.bf16.msra.mxu0 %v392
        %437 = vmatprep.subr.bf16.mxu0 0
        %438 = vmatpush1.bf16.msra.mxu0 %v391
        %439 = vmatprep.subr.bf16.mxu0 0
        %440 = vmatpush2.bf16.msra.mxu0 %v406
        %441 = vmatprep.subr.bf16.mxu0 0
        %442 = vmatpush2.bf16.msra.mxu0 %v405
        %443 = vmatprep.subr.bf16.mxu0 0
        %444 = vmatpush2.bf16.msra.mxu0 %v404
        %445 = vmatprep.subr.bf16.mxu0 0
        %446 = vmatpush2.bf16.msra.mxu0 %v403
        %447 = vmatprep.subr.bf16.mxu0 0
        %448 = vmatpush2.bf16.msra.mxu0 %v402
        %449 = vmatprep.subr.bf16.mxu0 0
        %450 = vmatpush2.bf16.msra.mxu0 %v401
        %451 = vmatprep.subr.bf16.mxu0 0
        %452 = vmatpush2.bf16.msra.mxu0 %v400
        %453 = vmatprep.subr.bf16.mxu0 0
        %454 = vmatpush2.bf16.msra.mxu0 %v399
        %455 = vmatprep.mubr.bf16.mxu0 %v324
        %456 = vmatmul.mubr.bf16.gmra.mxu0 %v323
        %v457 = vpop.f32.mrf.mxu0
        %v458 = vadd.f32 0.0, %v457
        %v459 = vpop.f32.mrf.mxu0
        %v460 = vpop.f32.mrf.mxu0
        %v461 = vpop.f32.mrf.mxu0
        %462 = vdwg.mxu0
        %v463 = vmul.f32 %v458, %v458
        %465 = vrot.lane.b32.xlu0 %v463, 112
        %v466 = vpop.permute.xlu0 %465
        %v468 = vadd.f32 %v463, %v466
        %v469 = vrsqrt.pop %v468
        %v470 = vmul.f32 %v468, %v469
        %vm471 = vcmp.eq.f32.partialorder %v468, inf
        %v472 = vsel %vm471, %v468, %v470
        %vm473 = vcmp.eq.f32.partialorder %v468, 0.0
        %v474 = vand.u32 %v468, 2147483648
        %v475 = vsel %vm473, %v474, %v472
        %v476 = vld [vmem:[%s277] sm:$0xf]
        %v477 = vmul.f32 %v475, %v476
        %vm478 = vcmask 125952
        %v479 = vsel %vm478, %v477, 0.0
        %480 = vadd.xlane.f32.xlu0 %v479
        %v481 = vpop.xlane.xlu0 %480
        %v482 = vld [vmem:[%s281] sm:$0xf]
        %v484 = vlaneseq
        %v485 = vand.u32 %v484, 127
        %v486 = vlaneseq
        %v487 = vshrl.u32 %v486, 7
        %v488 = vsub.s32 %v485, %v487
        %v489 = vrot.slane %v481, %v488
        %vm490 = vcmask 31744
        %v491 = vsel %vm490, %v489, 0
        %vm493 = vcmask 1043456
        %v495 = vsel %vm493, %v482, 0
        %497 = vmatprep.subr.mxu0 0.0
        %498 = vmatpush1.msra.mxu0 0.0
        %499 = vmatprep.subr.mxu0 0.0
        %500 = vmatpush1.msra.mxu0 0.0
        %501 = vmatprep.subr.mxu0 0.0
        %502 = vmatpush1.msra.mxu0 0.0
        %503 = vmatprep.subr.mxu0 0.0
        %504 = vmatpush1.msra.mxu0 0.0
        %505 = vmatprep.subr.mxu0 0.0
        %506 = vmatpush1.msra.mxu0 0.0
        %507 = vmatprep.subr.mxu0 0.0
        %508 = vmatpush1.msra.mxu0 0.0
        %509 = vmatprep.subr.mxu0 0.0
        %510 = vmatpush1.msra.mxu0 0.0
        %511 = vmatprep.subr.mxu0 0.0
        %512 = vmatpush1.msra.mxu0 0.0
        %513 = vmatprep.subr.mxu0 0.0
        %514 = vmatpush1.msra.mxu0 0.0
        %515 = vmatprep.subr.mxu0 0.0
        %516 = vmatpush1.msra.mxu0 0.0
        %517 = vmatprep.subr.mxu0 0.0
        %518 = vmatpush1.msra.mxu0 0.0
        %519 = vmatprep.subr.mxu0 0.0
        %520 = vmatpush1.msra.mxu0 0.0
        %521 = vmatprep.subr.mxu0 0.0
        %522 = vmatpush1.msra.mxu0 0.0
        %523 = vmatprep.subr.mxu0 0.0
        %524 = vmatpush1.msra.mxu0 0.0
        %525 = vmatprep.subr.mxu0 0.0
        %526 = vmatpush1.msra.mxu0 0.0
        %527 = vmatprep.subr.mxu0 0.0
        %528 = vmatpush1.msra.mxu0 %v495
        %529 = vmatprep.subr.mxu0 0.0
        %530 = vmatpush2.msra.mxu0 0.0
        %531 = vmatprep.subr.mxu0 0.0
        %532 = vmatpush2.msra.mxu0 0.0
        %533 = vmatprep.subr.mxu0 0.0
        %534 = vmatpush2.msra.mxu0 0.0
        %535 = vmatprep.subr.mxu0 0.0
        %536 = vmatpush2.msra.mxu0 0.0
        %537 = vmatprep.subr.mxu0 0.0
        %538 = vmatpush2.msra.mxu0 0.0
        %539 = vmatprep.subr.mxu0 0.0
        %540 = vmatpush2.msra.mxu0 0.0
        %541 = vmatprep.subr.mxu0 0.0
        %542 = vmatpush2.msra.mxu0 0.0
        %543 = vmatprep.subr.mxu0 0.0
        %544 = vmatpush2.msra.mxu0 0.0
        %545 = vmatprep.subr.mxu0 0.0
        %546 = vmatpush2.msra.mxu0 0.0
        %547 = vmatprep.subr.mxu0 0.0
        %548 = vmatpush2.msra.mxu0 0.0
        %549 = vmatprep.subr.mxu0 0.0
        %550 = vmatpush2.msra.mxu0 0.0
        %551 = vmatprep.subr.mxu0 0.0
        %552 = vmatpush2.msra.mxu0 0.0
        %553 = vmatprep.subr.mxu0 0.0
        %554 = vmatpush2.msra.mxu0 0.0
        %555 = vmatprep.subr.mxu0 0.0
        %556 = vmatpush2.msra.mxu0 0.0
        %557 = vmatprep.subr.mxu0 0.0
        %558 = vmatpush2.msra.mxu0 0.0
        %559 = vmatprep.subr.mxu0 0.0
        %560 = vmatpush2.msra.mxu0 0.0
        %561 = vmatprep.mubr.f32.mxu0 0.0
        %562 = vmatmul.mubr.f32.gmra.mxu0 %v491
        %v563 = vpop.f32.mrf.mxu0
        %v564 = vadd.f32 0.0, %v563
        %v565 = vpop.f32.mrf.mxu0
        %566 = vdwg.mxu0
        %p567 = scmp.eq.s32.totalorder %s24, 0
        // Predicated region
        $region41: #{tpu_custom_call.1} parent=39 // pred_check
          %p568 = pneg %p567
        $region42: #{tpu_custom_call.1} parent=39 // pred_check_branch
          %570 = sbr.rel (%p568) target = $region44
        $region43: #{tpu_custom_call.1} parent=39 // pred_region
          %v571 = vld [vmem:[%s4] sm:$0x1]
          %vm572 = vcmask 24576
          %573 = vst.msk [vmem:[%s264] sm:$0x1] %vm572, %v571
        $region44: #{tpu_custom_call.1} parent=39 // pred_fallthru
          _
        %v574 = vld [vmem:[%s264] sm:$0x1]
        %v575 = vadd.f32 %v574, %v564
        %vm576 = vcmask 24576
        %577 = vst.msk [vmem:[%s264] sm:$0x1] %vm576, %v575
        %s578 = sand.u32 %s161, 1
        %s579 = scalar_lea.sflag [#allocation3], %s578
        %s580 = sand.u32 %s161, 1
        %s581 = scalar_lea.vmem [#allocation2], %s580
        // Predicated region
        $region45: #{tpu_custom_call.1} parent=39 // pred_check
          %p582 = pneg %p171
        $region46: #{tpu_custom_call.1} parent=39 // pred_check_branch
          %584 = sbr.rel (%p582) target = $region48
        $region47: #{tpu_custom_call.1} parent=39 // pred_region
          %s586 = ssub.s32 16, 16
          %587 = vsyncadd %s579, %s586
          %s588 = smul.addr %s23, 16
          %s589 = scalar_lea.hbm %s5, %s588
          %s591 = sshll.u32 %s581, 4
          %s592 = int_to_ptr.vmem [resolvable:$true] %s591
          %594 = dma.vmem_to_hbm [thread:$0]  %s592, 16, %s589, %s579
        $region48: #{tpu_custom_call.1} parent=39 // pred_fallthru
          _
      $region40: #{tpu_custom_call.1} parent=5 // pred_fallthru
        _
      %p595 = scmp.le.s32.totalorder 2, %s14
      // Predicated region
      $region49: #{tpu_custom_call.1} parent=5 // pred_check
        %p596 = pneg %p595
      $region50: #{tpu_custom_call.1} parent=5 // pred_check_branch
        %598 = sbr.rel (%p596) target = $region52
      $region51: #{tpu_custom_call.1} parent=5 // pred_region
        %s599 = ssub.s32 %s14, 2
        // Predicated region
        $region53: #{tpu_custom_call.1} parent=51 // pred_check
          %p600 = pneg %p177
        $region54: #{tpu_custom_call.1} parent=51 // pred_check_branch
          %602 = sbr.rel (%p600) target = $region56
        $region55: #{tpu_custom_call.1} parent=51 // pred_region
          %s603 = sand.u32 %s162, 1
          %s604 = scalar_lea.sflag [#allocation3], %s603
          %s605 = sand.u32 %s162, 1
          %s606 = scalar_lea.vmem [#allocation2], %s605
          %607 = dma.done %s604, 16
        $region56: #{tpu_custom_call.1} parent=51 // pred_fallthru
          _
      $region52: #{tpu_custom_call.1} parent=5 // pred_fallthru
        _
    $region6: #{tpu_custom_call.1} parent=1 // loop_footer
      %s18 = sadd.s32 1, %s14
    $region7: #{tpu_custom_call.1} parent=1 // loop_footer_branch
      %13 = sbr.rel target = $region3
    $region8: #{tpu_custom_call.1} parent=1 // loop_exit
      _
    %608 = vsyncpa [#allocation3], 1
    %s609 = scalar_lea.sflag [#allocation3], 1
    %610 = vsyncpa %s609, 1

</llo_original>
